<compile_context>
chip_gen: v7x
topology: tpu7x:2x2x1
jax: 0.10.0
libtpu: 0.0.40
codegen_flags: <defaults>
</compile_context>

<pallas_src>
import jax
import jax.numpy as jnp
from jax.experimental import pallas as pl
from jax.experimental.pallas import tpu as pltpu


def regression_kernel(x_ref, w_ref, b_ref, o_ref):
    # x_ref: (TN, D) VMEM   w_ref: (1, D) VMEM (PyTorch nn.Linear layout)
    # b_ref: (1,)   SMEM    o_ref: (TN, 1) VMEM
    x = jnp.maximum(x_ref[...], 0.0)                        # ReLU (VPU)
    # Dropout: eval mode / p=0.0 -> identity (see TODO above).
    # out_dim == 1 => VPU elementwise mul + XLU lane-reduce beats a 1-column MXU
    # matmul and keeps exact f32 accumulation.
    y = jnp.sum(x * w_ref[...], axis=-1, keepdims=True)     # (TN, 1), f32
    o_ref[...] = y + b_ref[0]                               # SMEM scalar bias


def _cdiv(a, b):
    return -(-a // b)


def _round_up(a, m):
    return _cdiv(a, m) * m


def _choose_block_n(n, d, *, max_rows=1024, target_grid=4,
                    max_tile_bytes=8 << 20):
    """Pick the batch tile: as large as possible (HBM-read-bound streaming
    mat-vec) while (a) a double-buffered tile fits comfortably in VMEM on every
    generation (v7x has only 64 MiB physical) and (b) the grid keeps >=
    target_grid steps so the 'parallel' axis can shard across v7x's 2 TCs."""
    row_bytes = d * 4
    rows_by_vmem = max(8, (max_tile_bytes // row_bytes) // 8 * 8)
    rows_total = _round_up(n, 8)
    rows_by_grid = max(8, _round_up(_cdiv(rows_total, target_grid), 8))
    return max(8, min(max_rows, rows_by_vmem, rows_by_grid, rows_total))


def regression_forward(x, weight, bias, *, out_dropout=0.0, training=False,
                       block_n=None):
    """Matches PyTorch Regression.forward in eval mode.

    x: (..., D) f32, weight: (1, D) f32 (nn.Linear layout), bias: (1,) f32.
    Returns (..., 1) f32.
    """
    # TODO(synk): implement training-mode dropout with pltpu.prng_seed +
    # pltpu.stateful_bernoulli if training=True and out_dropout > 0 is needed.
    del out_dropout, training

    orig_shape = x.shape
    d = orig_shape[-1]
    x2 = x.reshape(-1, d).astype(jnp.float32)
    n = x2.shape[0]

    if block_n is None:
        block_n = _choose_block_n(n, d)
    grid = (_cdiv(n, block_n),)

    # VMEM budget: double-buffered x tile + weight + output + headroom.
    tile_bytes = block_n * d * 4
    vmem_limit = int(min(48 << 20, max(24 << 20, 4 * tile_bytes + (4 << 20))))

    out = pl.pallas_call(
        regression_kernel,
        out_shape=jax.ShapeDtypeStruct((n, 1), jnp.float32),
        grid=grid,
        in_specs=[
            # batch-tiled activations (lane-dense, (8,128)-friendly)
            pl.BlockSpec((block_n, d), lambda i: (i, 0)),
            # weight: constant index_map -> DMA'd once, VMEM-resident
            pl.BlockSpec((1, d), lambda i: (0, 0)),
            # bias: whole (1,) array in SMEM, read as a scalar
            pl.BlockSpec(memory_space=pltpu.MemorySpace.SMEM),
        ],
        out_specs=pl.BlockSpec((block_n, 1), lambda i: (i, 0)),
        compiler_params=pltpu.CompilerParams(
            dimension_semantics=("parallel",),
            vmem_limit_bytes=vmem_limit,
        ),
        cost_estimate=pl.CostEstimate(
            flops=2 * n * d,
            bytes_accessed=4 * (n * d + d + n + 1),
            transcendentals=0,
        ),
    )(x2, weight.astype(jnp.float32), bias.reshape(1).astype(jnp.float32))

    return out.reshape(orig_shape[:-1] + (1,))


def reference_forward(x, weight, bias):
    """Pure-JAX (XLA) reference matching PyTorch eval-mode semantics."""
    return jnp.sum(jax.nn.relu(x) * weight, axis=-1, keepdims=True) + bias


if __name__ == "__main__":
    INPUT_DIM = 256          # lane-aligned (multiple of 128)
    N = 32                   # small demo batch -> 4 grid steps of 8 rows

    key = jax.random.PRNGKey(0)
    kx, kw, kb = jax.random.split(key, 3)

    x = jax.random.normal(kx, (N, INPUT_DIM), jnp.float32)
    weight = jax.random.normal(kw, (1, INPUT_DIM), jnp.float32) * 0.05  # layer.weight
    bias = jax.random.normal(kb, (1,), jnp.float32) * 0.05              # layer.bias

    out = jax.block_until_ready(regression_forward(x, weight, bias))
    assert out.shape == (N, 1), out.shape

    ref = jax.block_until_ready(reference_forward(x, weight, bias))
    assert jnp.allclose(out, ref, rtol=1e-5, atol=1e-5), \
        f"max abs diff {jnp.max(jnp.abs(out - ref))}"

    print("KERNEL_OK")
</pallas_src>

<mosaic_0001>
module attributes {stable_mosaic.version = 11 : i64} {
  func.func @regression_kernel(%arg0: i32, %arg1: memref<8x256xf32, #tpu.memory_space<vmem>>, %arg2: memref<1x256xf32, #tpu.memory_space<vmem>>, %arg3: memref<1xf32, #tpu.memory_space<smem>>, %arg4: memref<8x1xf32, #tpu.memory_space<vmem>>) attributes {dimension_semantics = [#tpu.dimension_semantics<parallel>], iteration_bounds = array<i64: 4>, scalar_prefetch = 0 : i64, scratch_operands = 0 : i64, tpu.core_type = #tpu.core_type<tc>, window_params = [{transform_indices = @transform_0, window_bounds = array<i64: 8, 256>}, {pipeline_mode = #tpu.pipeline_mode<synchronous>, transform_indices = @transform_1, window_bounds = array<i64: 1, 256>}, {transform_indices = @transform_2, window_bounds = array<i64: 1>}, {transform_indices = @transform_3, window_bounds = array<i64: 8, 1>}]} {
    %c0 = arith.constant 0 : index
    %c0_0 = arith.constant 0 : index
    %0 = vector.load %arg1[%c0, %c0_0] : memref<8x256xf32, #tpu.memory_space<vmem>>, vector<8x256xf32>
    %cst = arith.constant 0.000000e+00 : f32
    %1 = vector.broadcast %cst : f32 to vector<8x256xf32>
    %2 = arith.maximumf %0, %1 : vector<8x256xf32>
    %c0_1 = arith.constant 0 : index
    %c0_2 = arith.constant 0 : index
    %3 = vector.load %arg2[%c0_1, %c0_2] : memref<1x256xf32, #tpu.memory_space<vmem>>, vector<1x256xf32>
    %4 = vector.broadcast %3 : vector<1x256xf32> to vector<8x256xf32>
    %5 = arith.mulf %2, %4 : vector<8x256xf32>
    %cst_3 = arith.constant dense<0.000000e+00> : vector<8xf32>
    %6 = vector.multi_reduction <add>, %5, %cst_3 [1] : vector<8x256xf32> to vector<8xf32>
    %7 = vector.shape_cast %6 : vector<8xf32> to vector<8x1xf32>
    %c0_4 = arith.constant 0 : index
    %8 = memref.load %arg3[%c0_4] : memref<1xf32, #tpu.memory_space<smem>>
    %9 = vector.broadcast %8 : f32 to vector<8x1xf32>
    %10 = arith.addf %7, %9 : vector<8x1xf32>
    %c0_5 = arith.constant 0 : index
    %c0_6 = arith.constant 0 : index
    %11 = vector.load %arg4[%c0_5, %c0_6] : memref<8x1xf32, #tpu.memory_space<vmem>>, vector<8x1xf32>
    tpu.vector_store %arg4[%c0_5, %c0_6], %10 {strides = array<i32>} : memref<8x1xf32, #tpu.memory_space<vmem>>, vector<8x1xf32>,
    return
  }
  func.func @transform_0(%arg0: i32) -> (i32, i32) {
    %c0_i32 = arith.constant 0 : i32
    %c0_i32_0 = arith.constant 0 : i32
    return %arg0, %c0_i32 : i32, i32
  }
  func.func @transform_1(%arg0: i32) -> (i32, i32) {
    %c0_i32 = arith.constant 0 : i32
    %c0_i32_0 = arith.constant 0 : i32
    %c0_i32_1 = arith.constant 0 : i32
    return %c0_i32, %c0_i32_0 : i32, i32
  }
  func.func @transform_2(%arg0: i32) -> i32 {
    %c0_i32 = arith.constant 0 : i32
    %c0_i32_0 = arith.constant 0 : i32
    return %c0_i32 : i32
  }
  func.func @transform_3(%arg0: i32) -> (i32, i32) {
    %c0_i32 = arith.constant 0 : i32
    %c0_i32_0 = arith.constant 0 : i32
    return %arg0, %c0_i32 : i32, i32
  }
}

</mosaic_0001>

<llo_original>
// kernel: tpu_custom_call.1
$region0: #{tpu_custom_call.1}
  #allocation0 [shape = 'u32[]', space=smem, size = 0x4, offset = 0x4, fixed_abs, tag = 'smem constant byte address 0x4 - core index']
  #allocation1 [shape = 'u32[144,128]{1,0:T(1,128)}', space=vmem, size = 0x12000, scoped, tag = 'internal scratch']
  #allocation2 [shape = 'f32[1]{0:T(128)S(6)}', space=smem, size = 0x200, scoped, tag = 'scoped memory for tpu_custom_call.1']
  %s0 = inlined_call_operand.hbm [shape: f32[32,256], index: 0, kind: input, shape index: {}]
  %s1 = inlined_call_operand.vmem [shape: f32[1,256], index: 1, kind: input, shape index: {}]
  %s2 = inlined_call_operand.<no memory space> [shape: f32[1], index: 2, kind: input, shape index: {}]
  %s3 = inlined_call_operand.vmem [shape: f32[32,1], index: 3, kind: output, shape index: {}]
  %s4 = sld [smem:[#allocation0]]
  $region49: #{tpu_custom_call.1} parent=0
    _
  %s6 = ssub.s32 1, %s4
  %s7 = scalar_select 0, %s6, %s4
  %8 = sst [smem:[#allocation2]] %s2
  $region1: #{tpu_custom_call.1} parent=0
    #allocation3 [shape = 'u8[16384]{0}', space=vmem, size = 0x4000, scoped, tag = 'input window, operand 0']
    #allocation4 [shape = 's32[2]{0}', space=sflag, size = 0x8, scoped, tag = 'scoped memory for tpu_custom_call.1']
    %9 = vsyncpa [#allocation4], 0
    %s10 = scalar_lea.sflag [#allocation4], 1
    %11 = vsyncpa %s10, 0
    loop: start=0, step=1, limit=6
    $region2: #{tpu_custom_call.1} parent=1 // loop_pre_header
      _
    $region3: #{tpu_custom_call.1} parent=1 // loop_header
      %s13 = sphi 0, %s17
      %p14 = scmp.ge.s32.totalorder %s13, 6
      %s23 = sphi 0, %s25
      %s26 = sphi 0, %s23
      %s27 = sphi 0, %s26
      %s43 = sphi 0, %s27
      %s47 = sphi 0, %s47
      %s49 = sphi 0, %s47
      %s50 = sphi 0, %s49
      %s64 = sphi 0, %s50
      %s68 = sphi 0, %s68
      %s70 = sphi 0, %s68
      %s71 = sphi 0, %s70
      %s85 = sphi 0, %s71
      %s91 = sphi 0, %s93
      %s94 = sphi 0, %s91
      %s95 = sphi 0, %s94
      %s111 = sphi 0, %s95
    $region4: #{tpu_custom_call.1} parent=1 // loop_header_branch
      %16 = sbr.rel (%p14) target = $region8
    $region5: #{tpu_custom_call.1} parent=1 // loop_body
      %s18 = ssub.s32 %s13, 1
      %s19 = ssub.s32 %s13, 2
      %s20 = sadd.s32 %s13, 1
      %s21 = ssub.s32 %s13, %s20
      %p22 = scmp.eq.s32.totalorder %s21, 0
      %s24 = sadd.s32 %s23, 1
      %s25 = scalar_select %p22, %s23, %s24
      %p28 = pneg %p22
      %p29 = scmp.eq.s32.totalorder %s13, 3
      %p30 = por %p28, %p29
      %p31 = scmp.ne.s32.totalorder %s23, %s26
      %p32 = scmp.eq.s32.totalorder %s13, 0
      %p33 = por %p31, %p32
      %p34 = scmp.ne.s32.totalorder %s23, %s26
      %p35 = scmp.eq.s32.totalorder %s18, 3
      %p36 = por %p34, %p35
      %p37 = scmp.ne.s32.totalorder %s26, %s27
      %p38 = scmp.eq.s32.totalorder %s18, 0
      %p39 = por %p37, %p38
      %p40 = scmp.ne.s32.totalorder %s26, %s27
      %p41 = scmp.eq.s32.totalorder %s19, 3
      %p42 = por %p40, %p41
      %p44 = scmp.ne.s32.totalorder %s27, %s43
      %p45 = scmp.eq.s32.totalorder %s19, 0
      %p46 = por %p44, %p45
      %s48 = sadd.s32 %s47, 1
      %p51 = scmp.eq.s32.totalorder %s13, 3
      %p52 = scmp.ne.s32.totalorder %s47, %s49
      %p53 = scmp.eq.s32.totalorder %s13, 0
      %p54 = por %p52, %p53
      %p55 = scmp.ne.s32.totalorder %s47, %s49
      %p56 = scmp.eq.s32.totalorder %s18, 3
      %p57 = por %p55, %p56
      %p58 = scmp.ne.s32.totalorder %s49, %s50
      %p59 = scmp.eq.s32.totalorder %s18, 0
      %p60 = por %p58, %p59
      %p61 = scmp.ne.s32.totalorder %s49, %s50
      %p62 = scmp.eq.s32.totalorder %s19, 3
      %p63 = por %p61, %p62
      %p65 = scmp.ne.s32.totalorder %s50, %s64
      %p66 = scmp.eq.s32.totalorder %s19, 0
      %p67 = por %p65, %p66
      %s69 = sadd.s32 %s68, 1
      %p72 = scmp.eq.s32.totalorder %s13, 3
      %p73 = scmp.ne.s32.totalorder %s68, %s70
      %p74 = scmp.eq.s32.totalorder %s13, 0
      %p75 = por %p73, %p74
      %p76 = scmp.ne.s32.totalorder %s68, %s70
      %p77 = scmp.eq.s32.totalorder %s18, 3
      %p78 = por %p76, %p77
      %p79 = scmp.ne.s32.totalorder %s70, %s71
      %p80 = scmp.eq.s32.totalorder %s18, 0
      %p81 = por %p79, %p80
      %p82 = scmp.ne.s32.totalorder %s70, %s71
      %p83 = scmp.eq.s32.totalorder %s19, 3
      %p84 = por %p82, %p83
      %p86 = scmp.ne.s32.totalorder %s71, %s85
      %p87 = scmp.eq.s32.totalorder %s19, 0
      %p88 = por %p86, %p87
      %s89 = ssub.s32 %s13, %s20
      %p90 = scmp.eq.s32.totalorder %s89, 0
      %s92 = sadd.s32 %s91, 1
      %s93 = scalar_select %p90, %s91, %s92
      %p96 = pneg %p90
      %p97 = scmp.eq.s32.totalorder %s13, 3
      %p98 = por %p96, %p97
      %p99 = scmp.ne.s32.totalorder %s91, %s94
      %p100 = scmp.eq.s32.totalorder %s13, 0
      %p101 = por %p99, %p100
      %p102 = scmp.ne.s32.totalorder %s91, %s94
      %p103 = scmp.eq.s32.totalorder %s18, 3
      %p104 = por %p102, %p103
      %p105 = scmp.ne.s32.totalorder %s94, %s95
      %p106 = scmp.eq.s32.totalorder %s18, 0
      %p107 = por %p105, %p106
      %p108 = scmp.ne.s32.totalorder %s94, %s95
      %p109 = scmp.eq.s32.totalorder %s19, 3
      %p110 = por %p108, %p109
      %p112 = scmp.ne.s32.totalorder %s95, %s111
      %p113 = scmp.eq.s32.totalorder %s19, 0
      %p114 = por %p112, %p113
      %p115 = scmp.le.s32.totalorder 1, %s13
      %p116 = scmp.lt.s32.totalorder %s13, 5
      %p117 = pnand %p115, %p116
      %p118 = pneg %p117
      // Predicated region
      $region9: #{tpu_custom_call.1} parent=5 // pred_check
        _
      $region10: #{tpu_custom_call.1} parent=5 // pred_check_branch
        %120 = sbr.rel (%p117) target = $region12
      $region11: #{tpu_custom_call.1} parent=5 // pred_region
        %s121 = ssub.s32 %s13, 1
        // Predicated region
        $region13: #{tpu_custom_call.1} parent=11 // pred_check
          %p122 = pneg %p60
        $region14: #{tpu_custom_call.1} parent=11 // pred_check_branch
          %124 = sbr.rel (%p122) target = $region16
        $region15: #{tpu_custom_call.1} parent=11 // pred_region
          _
        $region16: #{tpu_custom_call.1} parent=11 // pred_fallthru
          _
        // Predicated region
        $region17: #{tpu_custom_call.1} parent=11 // pred_check
          %p125 = pneg %p81
        $region18: #{tpu_custom_call.1} parent=11 // pred_check_branch
          %127 = sbr.rel (%p125) target = $region20
        $region19: #{tpu_custom_call.1} parent=11 // pred_region
          _
        $region20: #{tpu_custom_call.1} parent=11 // pred_fallthru
          _
      $region12: #{tpu_custom_call.1} parent=5 // pred_fallthru
        _
      %p128 = scmp.lt.s32.totalorder %s13, 4
      // Predicated region
      $region21: #{tpu_custom_call.1} parent=5 // pred_check
        %p129 = pneg %p128
      $region22: #{tpu_custom_call.1} parent=5 // pred_check_branch
        %131 = sbr.rel (%p129) target = $region24
      $region23: #{tpu_custom_call.1} parent=5 // pred_region
        // Predicated region
        $region25: #{tpu_custom_call.1} parent=23 // pred_check
          %p132 = pneg %p33
        $region26: #{tpu_custom_call.1} parent=23 // pred_check_branch
          %134 = sbr.rel (%p132) target = $region28
        $region27: #{tpu_custom_call.1} parent=23 // pred_region
          %s135 = sand.u32 %s23, 1
          %s136 = scalar_lea.sflag [#allocation4], %s135
          %s137 = sand.u32 %s23, 1
          %s138 = smul.addr %s137, 16
          %s139 = scalar_lea.vmem [#allocation3], %s138
          %s141 = ssub.s32 256, 256
          %142 = vsyncadd %s136, %s141
          %s143 = smul.addr %s13, 2
          %s144 = smul.addr %s143, 128
          %s145 = scalar_lea.hbm %s0, %s144
          %s147 = sshll.u32 %s139, 4
          %s148 = int_to_ptr.vmem [resolvable:$true] %s147
          %150 = dma.hbm_to_vmem [thread:$0]  %s145, 256, %s148, %s136
        $region28: #{tpu_custom_call.1} parent=23 // pred_fallthru
          _
      $region24: #{tpu_custom_call.1} parent=5 // pred_fallthru
        _
      %p151 = scmp.le.s32.totalorder 1, %s13
      %p152 = scmp.lt.s32.totalorder %s13, 5
      %p153 = pnand %p151, %p152
      %p154 = pneg %p153
      // Predicated region
      $region29: #{tpu_custom_call.1} parent=5 // pred_check
        _
      $region30: #{tpu_custom_call.1} parent=5 // pred_check_branch
        %156 = sbr.rel (%p153) target = $region32
      $region31: #{tpu_custom_call.1} parent=5 // pred_region
        %s157 = ssub.s32 %s13, 1
        %s158 = sand.u32 %s26, 1
        %s159 = scalar_lea.sflag [#allocation4], %s158
        %s160 = sand.u32 %s26, 1
        %s161 = smul.addr %s160, 16
        %s162 = scalar_lea.vmem [#allocation3], %s161
        // Predicated region
        $region33: #{tpu_custom_call.1} parent=31 // pred_check
          %p163 = pneg %p39
        $region34: #{tpu_custom_call.1} parent=31 // pred_check_branch
          %165 = sbr.rel (%p163) target = $region36
        $region35: #{tpu_custom_call.1} parent=31 // pred_region
          %166 = dma.done %s159, 256
        $region36: #{tpu_custom_call.1} parent=31 // pred_fallthru
          _
        %s167 = sand.u32 %s26, 1
        %s168 = scalar_lea.sflag [#allocation4], %s167
        %s169 = sand.u32 %s26, 1
        %s170 = smul.addr %s169, 16
        %s171 = scalar_lea.vmem [#allocation3], %s170
        %p172 = pneg %p39
        %p173 = pneg %p36
        %p174 = pneg %p60
        %p175 = pneg %p57
        %p176 = pneg %p81
        %p177 = pneg %p78
        %p178 = pneg %p107
        %p179 = pneg %p104
        %p180 = scmp.lt.s32.totalorder %s18, 3
        %s181 = scalar_select %p180, %s18, 3
        %s182 = smul.addr %s181, 8
        %s183 = scalar_lea.vmem %s3, %s182
        %p184 = scmp.lt.s32.totalorder %s18, 3
        %s185 = scalar_select %p184, %s18, 3
        %s186 = smul.addr %s185, 8
        %s187 = scalar_lea.vmem %s3, %s186
        %v188 = vld [vmem:[%s162] sm:$0xff]
        %v189 = vld [vmem:[%s162 + $0x8] sm:$0xff]
        %v190 = vmax.f32 %v188, 0.0
        %v191 = vmax.f32 %v189, 0.0
        %v192 = vld [vmem:[%s1] sm:$0x3]
        %v194 = vlaneseq
        %v195 = vshrl.u32 %v194, 7
        %v196 = vsub.s32 0, %v195
        %v197 = vrot.slane %v192, %v196
        %v198 = vlaneseq
        %v199 = vshrl.u32 %v198, 7
        %v200 = vsub.s32 1, %v199
        %v201 = vrot.slane %v192, %v200
        %v204 = vmul.f32 %v190, %v197
        %v205 = vmul.f32 %v191, %v201
        %v206 = vadd.f32 %v204, %v205
        %207 = vadd.xlane.f32.xlu0 %v206
        %v208 = vpop.xlane.xlu0 %207
        %s209 = sld [smem:[#allocation2]]
        %v210 = vstv %s209
        %v211 = vadd.f32 %v208, %v210
        %vm212 = vcmask 7168
        %213 = vst.msk [vmem:[%s187] sm:$0xff] %vm212, %v211
        %p214 = scmp.lt.s32.totalorder %s18, 3
        %s215 = scalar_select %p214, %s18, 3
        %s216 = smul.addr %s215, 8
        %s217 = scalar_lea.vmem %s3, %s216
        // Predicated region
        $region37: #{tpu_custom_call.1} parent=31 // pred_check
          %p218 = pneg %p104
        $region38: #{tpu_custom_call.1} parent=31 // pred_check_branch
          %220 = sbr.rel (%p218) target = $region40
        $region39: #{tpu_custom_call.1} parent=31 // pred_region
          _
        $region40: #{tpu_custom_call.1} parent=31 // pred_fallthru
          _
      $region32: #{tpu_custom_call.1} parent=5 // pred_fallthru
        _
      %p221 = scmp.le.s32.totalorder 2, %s13
      // Predicated region
      $region41: #{tpu_custom_call.1} parent=5 // pred_check
        %p222 = pneg %p221
      $region42: #{tpu_custom_call.1} parent=5 // pred_check_branch
        %224 = sbr.rel (%p222) target = $region44
      $region43: #{tpu_custom_call.1} parent=5 // pred_region
        %s225 = ssub.s32 %s13, 2
        // Predicated region
        $region45: #{tpu_custom_call.1} parent=43 // pred_check
          %p226 = pneg %p110
        $region46: #{tpu_custom_call.1} parent=43 // pred_check_branch
          %228 = sbr.rel (%p226) target = $region48
        $region47: #{tpu_custom_call.1} parent=43 // pred_region
          %p229 = scmp.lt.s32.totalorder %s19, 3
          %s230 = scalar_select %p229, %s19, 3
          %s231 = smul.addr %s230, 8
          %s232 = scalar_lea.vmem %s3, %s231
        $region48: #{tpu_custom_call.1} parent=43 // pred_fallthru
          _
      $region44: #{tpu_custom_call.1} parent=5 // pred_fallthru
        _
    $region6: #{tpu_custom_call.1} parent=1 // loop_footer
      %s17 = sadd.s32 1, %s13
    $region7: #{tpu_custom_call.1} parent=1 // loop_footer_branch
      %12 = sbr.rel target = $region3
    $region8: #{tpu_custom_call.1} parent=1 // loop_exit
      _
    %233 = vsyncpa [#allocation4], 1
    %s234 = scalar_lea.sflag [#allocation4], 1
    %235 = vsyncpa %s234, 1

</llo_original>
